<compile_context>
chip_gen: v5e
topology: v5e:2x2
jax: 0.10.0
libtpu: 0.0.40
codegen_flags: <defaults>
</compile_context>

<pallas_src>
import jax
import jax.numpy as jnp
from jax import lax
from jax.experimental import pallas as pl
from jax.experimental.pallas import tpu as pltpu


def _matching_sim_kernel(t_ref, s_ref, tm_ref, sm_ref, o_ref):
    # t_ref : (G, tT, D)   test reps tile (native dtype)
    # s_ref : (G, tL, D)   support reps tile (native dtype)
    # tm_ref: (G, tT, 1)   float32 test pad mask
    # sm_ref: (G, 1, tL)   float32 support pad mask
    # o_ref : (G, tT, tL)  similarity tile
    sim = lax.dot_general(
        t_ref[...], s_ref[...],
        dimension_numbers=(((2,), (2,)), ((0,), (0,))),   # batched last-dim dot
        preferred_element_type=jnp.float32,
    )
    # Mask multiply on the VPU (hidden under the HBM-bound store traffic).
    o_ref[...] = (sim * tm_ref[...] * sm_ref[...]).astype(o_ref.dtype)


def _pick_block_n(N, per_pair_bytes, vmem_budget, min_steps=8):
    """Pairs-per-step G and the N padding it implies.

    Targets >= min_steps grid steps (pipelining + megacore sharding) while
    keeping the double-buffered per-step footprint under vmem_budget.  Prefers
    a divisor of N near the cap so the reps usually need no padding.
    """
    cap_bytes = max(1, vmem_budget // max(per_pair_bytes, 1))
    cap_steps = max(1, N // min_steps) if N >= min_steps else 1
    cap = int(max(1, min(N, cap_bytes, cap_steps)))
    lo = max(1, (cap + 1) // 2)
    for g in range(cap, lo - 1, -1):          # nearby divisor -> no padding
        if N % g == 0:
            return g, 0
    return cap, (-N) % cap                    # ragged tail -> pad N


def _seq_tile(X, max_tile):
    """Full extent when small; otherwise a multiple-of-128 tile minimizing pad."""
    if X <= max_tile:
        return X, 0
    best_t, best_pad = max_tile, (-X) % max_tile
    t = max_tile - 128
    while t >= 128:
        pad = (-X) % t
        if pad < best_pad:
            best_t, best_pad = t, pad
        t -= 128
    return best_t, best_pad


def matching_similarity_scorer(test_reps, support_reps,
                               test_output_mask, support_output_mask,
                               block_n=None, out_dtype=jnp.float32,
                               max_seq_tile=512):
    """
    :param test_reps:           (B, S, T, D)
    :param support_reps:        (B, S, L, D)
    :param test_output_mask:    (B, T)       pad mask
    :param support_output_mask: (B, S, L)    pad mask
    :return: similarity matrix  (B, S, T, L) in out_dtype (default float32)
    """
    B, S, T, D = test_reps.shape
    L = support_reps.shape[2]
    N = B * S

    in_itemsize = jnp.dtype(test_reps.dtype).itemsize
    out_itemsize = jnp.dtype(out_dtype).itemsize

    # Flatten only (no value-touching HBM pass over the reps).
    t_flat = test_reps.reshape(N, T, D)
    s_flat = support_reps.reshape(N, L, D)
    # Tiny mask tensors laid out to broadcast directly against (G, tT, tL).
    tm = jnp.broadcast_to(
        test_output_mask.astype(jnp.float32)[:, None, :], (B, S, T)
    ).reshape(N, T, 1)
    sm = support_output_mask.astype(jnp.float32).reshape(N, 1, L)

    # Optional 2-D (T, L) tiling for very long sequences (D stays resident).
    tT, padT = _seq_tile(T, max_seq_tile)
    tL, padL = _seq_tile(L, max_seq_tile)

    # Generation-aware VMEM budget (v7x per-TC 64 MiB is the binding case).
    try:
        vmem_cap = int(pltpu.get_tpu_info().vmem_capacity_bytes)
    except Exception:
        vmem_cap = 64 << 20
    vmem_limit = int(min(vmem_cap * 3 // 4, 96 << 20))
    vmem_budget = vmem_limit // 3   # target for the double-buffered working set

    per_pair = 2 * ((tT + tL) * D * in_itemsize      # reps tiles (x2 buffers)
                    + (tT + tL) * 4                  # mask tiles
                    + tT * tL * out_itemsize)        # output tile
    if block_n is not None:
        G = int(block_n)
        padN = (-N) % G
    else:
        G, padN = _pick_block_n(N, per_pair, vmem_budget)

    # Pad only when an axis does not divide evenly; pad rows/cols produce
    # zeros and are sliced off afterwards.
    if padN:
        t_flat = jnp.pad(t_flat, ((0, padN), (0, 0), (0, 0)))
        s_flat = jnp.pad(s_flat, ((0, padN), (0, 0), (0, 0)))
        tm = jnp.pad(tm, ((0, padN), (0, 0), (0, 0)))
        sm = jnp.pad(sm, ((0, padN), (0, 0), (0, 0)))
    if padT:
        t_flat = jnp.pad(t_flat, ((0, 0), (0, padT), (0, 0)))
        tm = jnp.pad(tm, ((0, 0), (0, padT), (0, 0)))
    if padL:
        s_flat = jnp.pad(s_flat, ((0, 0), (0, padL), (0, 0)))
        sm = jnp.pad(sm, ((0, 0), (0, 0), (0, padL)))

    Np, Tp, Lp = N + padN, T + padT, L + padL
    grid = (Np // G, Tp // tT, Lp // tL)

    out = pl.pallas_call(
        _matching_sim_kernel,
        out_shape=jax.ShapeDtypeStruct((Np, Tp, Lp), out_dtype),
        grid_spec=pltpu.PrefetchScalarGridSpec(
            num_scalar_prefetch=0,
            grid=grid,
            in_specs=[
                pl.BlockSpec((G, tT, D), lambda n, ti, lj: (n, ti, 0)),
                pl.BlockSpec((G, tL, D), lambda n, ti, lj: (n, lj, 0)),
                pl.BlockSpec((G, tT, 1), lambda n, ti, lj: (n, ti, 0)),
                pl.BlockSpec((G, 1, tL), lambda n, ti, lj: (n, 0, lj)),
            ],
            out_specs=pl.BlockSpec((G, tT, tL), lambda n, ti, lj: (n, ti, lj)),
        ),
        compiler_params=pltpu.CompilerParams(
            # No reduction axis (D is fully resident) -> everything parallel;
            # leading N axis shards across the two TensorCores on v7x.
            dimension_semantics=("parallel", "parallel", "parallel"),
            vmem_limit_bytes=vmem_limit,
        ),
    )(t_flat, s_flat, tm, sm)

    if padN or padT or padL:
        out = out[:N, :T, :L]
    return out.reshape(B, S, T, L)


def _reference(test_reps, support_reps, test_output_mask, support_output_mask):
    """Pure-JAX reference mirroring the PyTorch forward."""
    B, S, T, D = test_reps.shape
    L = support_reps.shape[2]
    t = test_reps.reshape(B * S, T, D).astype(jnp.float32)
    s = support_reps.reshape(B * S, L, D).astype(jnp.float32)
    sim = jnp.einsum("ntd,nld->ntl", t, s)
    tmask = jnp.broadcast_to(test_output_mask[:, None, :], (B, S, T)) \
              .reshape(B * S, T).astype(jnp.float32)
    smask = support_output_mask.reshape(B * S, L).astype(jnp.float32)
    mask = tmask[:, :, None] * smask[:, None, :]
    return (sim * mask).reshape(B, S, T, L)


if __name__ == "__main__":
    key = jax.random.PRNGKey(0)

    # --- case 1: module-typical small shapes ---
    B, S, T, L, D = 2, 2, 8, 8, 32
    k1, k2, k3, k4 = jax.random.split(key, 4)
    test_reps = jax.random.normal(k1, (B, S, T, D), dtype=jnp.float32)
    support_reps = jax.random.normal(k2, (B, S, L, D), dtype=jnp.float32)
    test_output_mask = (jax.random.uniform(k3, (B, T)) > 0.3).astype(jnp.float32)
    support_output_mask = (jax.random.uniform(k4, (B, S, L)) > 0.3).astype(jnp.float32)

    ref = _reference(test_reps, support_reps, test_output_mask, support_output_mask)

    out = matching_similarity_scorer(test_reps, support_reps,
                                     test_output_mask, support_output_mask)
    out = jax.block_until_ready(out)
    assert out.shape == (B, S, T, L)
    assert jnp.allclose(out, ref, atol=1e-4, rtol=1e-4)

    # multi-step grid (G=2) for pipeline coverage
    out2 = jax.block_until_ready(
        matching_similarity_scorer(test_reps, support_reps,
                                   test_output_mask, support_output_mask,
                                   block_n=2))
    assert jnp.allclose(out2, ref, atol=1e-4, rtol=1e-4)

    # ragged N (G=3 does not divide N=4) exercises the padding path
    out3 = jax.block_until_ready(
        matching_similarity_scorer(test_reps, support_reps,
                                   test_output_mask, support_output_mask,
                                   block_n=3))
    assert jnp.allclose(out3, ref, atol=1e-4, rtol=1e-4)

    # --- case 2: exercise the large-L tiling path (tL = 128 < L = 256) ---
    B2, S2, T2, L2, D2 = 1, 2, 16, 256, 32
    j1, j2, j3, j4 = jax.random.split(jax.random.PRNGKey(1), 4)
    tr2 = jax.random.normal(j1, (B2, S2, T2, D2), dtype=jnp.float32)
    sr2 = jax.random.normal(j2, (B2, S2, L2, D2), dtype=jnp.float32)
    tm2 = (jax.random.uniform(j3, (B2, T2)) > 0.3).astype(jnp.float32)
    sm2 = (jax.random.uniform(j4, (B2, S2, L2)) > 0.3).astype(jnp.float32)
    ref2 = _reference(tr2, sr2, tm2, sm2)
    out4 = jax.block_until_ready(
        matching_similarity_scorer(tr2, sr2, tm2, sm2, max_seq_tile=128))
    assert out4.shape == (B2, S2, T2, L2)
    assert jnp.allclose(out4, ref2, atol=1e-4, rtol=1e-4)

    print("KERNEL_OK")
</pallas_src>

<mosaic_0001>
module attributes {stable_mosaic.version = 11 : i64} {
  func.func @_matching_sim_kernel(%arg0: i32, %arg1: i32, %arg2: i32, %arg3: memref<1x8x32xf32, #tpu.memory_space<vmem>>, %arg4: memref<1x8x32xf32, #tpu.memory_space<vmem>>, %arg5: memref<1x8x1xf32, #tpu.memory_space<vmem>>, %arg6: memref<1x1x8xf32, #tpu.memory_space<vmem>>, %arg7: memref<1x8x8xf32, #tpu.memory_space<vmem>>) attributes {dimension_semantics = [#tpu.dimension_semantics<parallel>, #tpu.dimension_semantics<parallel>, #tpu.dimension_semantics<parallel>], iteration_bounds = array<i64: 4, 1, 1>, scalar_prefetch = 0 : i64, scratch_operands = 0 : i64, tpu.core_type = #tpu.core_type<tc>, window_params = [{transform_indices = @transform_0, window_bounds = array<i64: 1, 8, 32>}, {transform_indices = @transform_1, window_bounds = array<i64: 1, 8, 32>}, {transform_indices = @transform_2, window_bounds = array<i64: 1, 8, 1>}, {transform_indices = @transform_3, window_bounds = array<i64: 1, 1, 8>}, {transform_indices = @transform_4, window_bounds = array<i64: 1, 8, 8>}]} {
    %c0 = arith.constant 0 : index
    %c0_0 = arith.constant 0 : index
    %c0_1 = arith.constant 0 : index
    %0 = vector.load %arg3[%c0, %c0_0, %c0_1] : memref<1x8x32xf32, #tpu.memory_space<vmem>>, vector<1x8x32xf32>
    %c0_2 = arith.constant 0 : index
    %c0_3 = arith.constant 0 : index
    %c0_4 = arith.constant 0 : index
    %1 = vector.load %arg4[%c0_2, %c0_3, %c0_4] : memref<1x8x32xf32, #tpu.memory_space<vmem>>, vector<1x8x32xf32>
    %cst = arith.constant dense<0.000000e+00> : vector<1x8x8xf32>
    %2 = tpu.matmul %0, %1, %cst {dimension_numbers = #tpu.dot_dimension_numbers<[2], [2], [1], [1], [0, 0, 0, 1, 1, 1], [0], [0]>} : vector<1x8x32xf32>, vector<1x8x32xf32>, vector<1x8x8xf32> -> vector<1x8x8xf32>
    %c0_5 = arith.constant 0 : index
    %c0_6 = arith.constant 0 : index
    %c0_7 = arith.constant 0 : index
    %3 = vector.load %arg5[%c0_5, %c0_6, %c0_7] : memref<1x8x1xf32, #tpu.memory_space<vmem>>, vector<1x8x1xf32>
    %4 = vector.broadcast %3 : vector<1x8x1xf32> to vector<1x8x8xf32>
    %5 = arith.mulf %2, %4 : vector<1x8x8xf32>
    %c0_8 = arith.constant 0 : index
    %c0_9 = arith.constant 0 : index
    %c0_10 = arith.constant 0 : index
    %6 = vector.load %arg6[%c0_8, %c0_9, %c0_10] : memref<1x1x8xf32, #tpu.memory_space<vmem>>, vector<1x1x8xf32>
    %7 = vector.broadcast %6 : vector<1x1x8xf32> to vector<1x8x8xf32>
    %8 = arith.mulf %5, %7 : vector<1x8x8xf32>
    %c0_11 = arith.constant 0 : index
    %c0_12 = arith.constant 0 : index
    %c0_13 = arith.constant 0 : index
    %9 = vector.load %arg7[%c0_11, %c0_12, %c0_13] : memref<1x8x8xf32, #tpu.memory_space<vmem>>, vector<1x8x8xf32>
    tpu.vector_store %arg7[%c0_11, %c0_12, %c0_13], %8 {strides = array<i32>} : memref<1x8x8xf32, #tpu.memory_space<vmem>>, vector<1x8x8xf32>,
    return
  }
  func.func @transform_0(%arg0: i32, %arg1: i32, %arg2: i32) -> (i32, i32, i32) {
    %c0_i32 = arith.constant 0 : i32
    %c0_i32_0 = arith.constant 0 : i32
    return %arg0, %arg1, %c0_i32 : i32, i32, i32
  }
  func.func @transform_1(%arg0: i32, %arg1: i32, %arg2: i32) -> (i32, i32, i32) {
    %c0_i32 = arith.constant 0 : i32
    %c0_i32_0 = arith.constant 0 : i32
    return %arg0, %arg2, %c0_i32 : i32, i32, i32
  }
  func.func @transform_2(%arg0: i32, %arg1: i32, %arg2: i32) -> (i32, i32, i32) {
    %c0_i32 = arith.constant 0 : i32
    %c0_i32_0 = arith.constant 0 : i32
    return %arg0, %arg1, %c0_i32 : i32, i32, i32
  }
  func.func @transform_3(%arg0: i32, %arg1: i32, %arg2: i32) -> (i32, i32, i32) {
    %c0_i32 = arith.constant 0 : i32
    %c0_i32_0 = arith.constant 0 : i32
    return %arg0, %c0_i32, %arg2 : i32, i32, i32
  }
  func.func @transform_4(%arg0: i32, %arg1: i32, %arg2: i32) -> (i32, i32, i32) {
    %c0_i32 = arith.constant 0 : i32
    return %arg0, %arg1, %arg2 : i32, i32, i32
  }
}

</mosaic_0001>

<llo_original>
// kernel: tpu_custom_call.1
$region0: #{tpu_custom_call.1}
  #allocation0 [shape = 'u32[]', space=smem, size = 0x4, offset = 0x4, fixed_abs, tag = 'smem constant byte address 0x4 - core index']
  #allocation1 [shape = 'u32[72,128]{1,0:T(1,128)}', space=vmem, size = 0x9000, scoped, tag = 'internal scratch']
  %s0 = inlined_call_operand.vmem [shape: f32[4,8,32], index: 0, kind: input, shape index: {}]
  %s1 = inlined_call_operand.hbm [shape: f32[4,8,32], index: 1, kind: input, shape index: {}]
  %s2 = inlined_call_operand.vmem [shape: f32[4,8,1], index: 2, kind: input, shape index: {}]
  %s3 = inlined_call_operand.vmem [shape: f32[4,1,8], index: 3, kind: input, shape index: {}]
  %s4 = inlined_call_operand.hbm [shape: f32[4,8,8], index: 4, kind: output, shape index: {}]
  %s5 = sld [smem:[#allocation0]]
  $region53: #{tpu_custom_call.1} parent=0
    _
  %s7 = ssub.s32 1, %s5
  %s8 = scalar_select 0, %s7, %s5
  $region1: #{tpu_custom_call.1} parent=0
    #allocation2 [shape = 'u8[8192]{0}', space=vmem, size = 0x2000, scoped, tag = 'input window, operand 1']
    #allocation3 [shape = 's32[2]{0}', space=sflag, size = 0x8, scoped, tag = 'scoped memory for tpu_custom_call.1']
    #allocation4 [shape = 's32[2]{0}', space=sflag, size = 0x8, scoped, tag = 'scoped memory for tpu_custom_call.1']
    #allocation5 [shape = 'u8[8192]{0}', space=vmem, size = 0x2000, scoped, tag = 'output window, operand 0']
    %9 = vsyncpa [#allocation3], 0
    %s10 = scalar_lea.sflag [#allocation3], 1
    %11 = vsyncpa %s10, 0
    %12 = vsyncpa [#allocation4], 0
    %s13 = scalar_lea.sflag [#allocation4], 1
    %14 = vsyncpa %s13, 0
    loop: start=0, step=1, limit=6
    $region2: #{tpu_custom_call.1} parent=1 // loop_pre_header
      _
    $region3: #{tpu_custom_call.1} parent=1 // loop_header
      %s16 = sphi 0, %s20
      %p17 = scmp.ge.s32.totalorder %s16, 6
      %s23 = sphi 0, %s42
      %s24 = sphi 0, %s38
      %s25 = sphi 0, %s34
      %s26 = sphi 0, %s23
      %s27 = sphi 0, %s24
      %s28 = sphi 0, %s25
      %s29 = sphi 0, %s26
      %s30 = sphi 0, %s27
      %s31 = sphi 0, %s28
      %s47 = sphi 0, %s49
      %s50 = sphi 0, %s47
      %s51 = sphi 0, %s50
      %s67 = sphi 0, %s51
      %s75 = sphi 0, %s77
      %s78 = sphi 0, %s75
      %s79 = sphi 0, %s78
      %s95 = sphi 0, %s79
      %s103 = sphi 0, %s105
      %s106 = sphi 0, %s103
      %s107 = sphi 0, %s106
      %s123 = sphi 0, %s107
      %s131 = sphi 0, %s133
      %s134 = sphi 0, %s131
      %s135 = sphi 0, %s134
      %s151 = sphi 0, %s135
      %s161 = sphi 0, %s163
      %s164 = sphi 0, %s161
      %s165 = sphi 0, %s164
      %s181 = sphi 0, %s165
    $region4: #{tpu_custom_call.1} parent=1 // loop_header_branch
      %19 = sbr.rel (%p17) target = $region8
    $region5: #{tpu_custom_call.1} parent=1 // loop_body
      %s21 = ssub.s32 %s16, 1
      %s22 = ssub.s32 %s16, 2
      %s32 = sadd.s32 1, %s25
      %p33 = scmp.ge.s32.totalorder %s32, 1
      %s34 = scalar_select %p33, 0, %s32
      %s35 = sadd.s32 1, %s24
      %s36 = scalar_select %p33, %s35, %s24
      %p37 = scmp.ge.s32.totalorder %s36, 1
      %s38 = scalar_select %p37, 0, %s36
      %s39 = sadd.s32 1, %s23
      %s40 = scalar_select %p37, %s39, %s23
      %p41 = scmp.ge.s32.totalorder %s40, 4
      %s42 = scalar_select %p41, 0, %s40
      %s43 = ssub.s32 %s23, %s42
      %s44 = ssub.s32 %s24, %s38
      %s45 = sor.u32 %s43, %s44
      %p46 = scmp.eq.s32.totalorder %s45, 0
      %s48 = sadd.s32 %s47, 1
      %s49 = scalar_select %p46, %s47, %s48
      %p52 = pneg %p46
      %p53 = scmp.eq.s32.totalorder %s16, 3
      %p54 = por %p52, %p53
      %p55 = scmp.ne.s32.totalorder %s47, %s50
      %p56 = scmp.eq.s32.totalorder %s16, 0
      %p57 = por %p55, %p56
      %p58 = scmp.ne.s32.totalorder %s47, %s50
      %p59 = scmp.eq.s32.totalorder %s21, 3
      %p60 = por %p58, %p59
      %p61 = scmp.ne.s32.totalorder %s50, %s51
      %p62 = scmp.eq.s32.totalorder %s21, 0
      %p63 = por %p61, %p62
      %p64 = scmp.ne.s32.totalorder %s50, %s51
      %p65 = scmp.eq.s32.totalorder %s22, 3
      %p66 = por %p64, %p65
      %p68 = scmp.ne.s32.totalorder %s51, %s67
      %p69 = scmp.eq.s32.totalorder %s22, 0
      %p70 = por %p68, %p69
      %s71 = ssub.s32 %s23, %s42
      %s72 = ssub.s32 %s25, %s34
      %s73 = sor.u32 %s71, %s72
      %p74 = scmp.eq.s32.totalorder %s73, 0
      %s76 = sadd.s32 %s75, 1
      %s77 = scalar_select %p74, %s75, %s76
      %p80 = pneg %p74
      %p81 = scmp.eq.s32.totalorder %s16, 3
      %p82 = por %p80, %p81
      %p83 = scmp.ne.s32.totalorder %s75, %s78
      %p84 = scmp.eq.s32.totalorder %s16, 0
      %p85 = por %p83, %p84
      %p86 = scmp.ne.s32.totalorder %s75, %s78
      %p87 = scmp.eq.s32.totalorder %s21, 3
      %p88 = por %p86, %p87
      %p89 = scmp.ne.s32.totalorder %s78, %s79
      %p90 = scmp.eq.s32.totalorder %s21, 0
      %p91 = por %p89, %p90
      %p92 = scmp.ne.s32.totalorder %s78, %s79
      %p93 = scmp.eq.s32.totalorder %s22, 3
      %p94 = por %p92, %p93
      %p96 = scmp.ne.s32.totalorder %s79, %s95
      %p97 = scmp.eq.s32.totalorder %s22, 0
      %p98 = por %p96, %p97
      %s99 = ssub.s32 %s23, %s42
      %s100 = ssub.s32 %s24, %s38
      %s101 = sor.u32 %s99, %s100
      %p102 = scmp.eq.s32.totalorder %s101, 0
      %s104 = sadd.s32 %s103, 1
      %s105 = scalar_select %p102, %s103, %s104
      %p108 = pneg %p102
      %p109 = scmp.eq.s32.totalorder %s16, 3
      %p110 = por %p108, %p109
      %p111 = scmp.ne.s32.totalorder %s103, %s106
      %p112 = scmp.eq.s32.totalorder %s16, 0
      %p113 = por %p111, %p112
      %p114 = scmp.ne.s32.totalorder %s103, %s106
      %p115 = scmp.eq.s32.totalorder %s21, 3
      %p116 = por %p114, %p115
      %p117 = scmp.ne.s32.totalorder %s106, %s107
      %p118 = scmp.eq.s32.totalorder %s21, 0
      %p119 = por %p117, %p118
      %p120 = scmp.ne.s32.totalorder %s106, %s107
      %p121 = scmp.eq.s32.totalorder %s22, 3
      %p122 = por %p120, %p121
      %p124 = scmp.ne.s32.totalorder %s107, %s123
      %p125 = scmp.eq.s32.totalorder %s22, 0
      %p126 = por %p124, %p125
      %s127 = ssub.s32 %s23, %s42
      %s128 = ssub.s32 %s25, %s34
      %s129 = sor.u32 %s127, %s128
      %p130 = scmp.eq.s32.totalorder %s129, 0
      %s132 = sadd.s32 %s131, 1
      %s133 = scalar_select %p130, %s131, %s132
      %p136 = pneg %p130
      %p137 = scmp.eq.s32.totalorder %s16, 3
      %p138 = por %p136, %p137
      %p139 = scmp.ne.s32.totalorder %s131, %s134
      %p140 = scmp.eq.s32.totalorder %s16, 0
      %p141 = por %p139, %p140
      %p142 = scmp.ne.s32.totalorder %s131, %s134
      %p143 = scmp.eq.s32.totalorder %s21, 3
      %p144 = por %p142, %p143
      %p145 = scmp.ne.s32.totalorder %s134, %s135
      %p146 = scmp.eq.s32.totalorder %s21, 0
      %p147 = por %p145, %p146
      %p148 = scmp.ne.s32.totalorder %s134, %s135
      %p149 = scmp.eq.s32.totalorder %s22, 3
      %p150 = por %p148, %p149
      %p152 = scmp.ne.s32.totalorder %s135, %s151
      %p153 = scmp.eq.s32.totalorder %s22, 0
      %p154 = por %p152, %p153
      %s155 = ssub.s32 %s23, %s42
      %s156 = ssub.s32 %s24, %s38
      %s157 = sor.u32 %s155, %s156
      %s158 = ssub.s32 %s25, %s34
      %s159 = sor.u32 %s157, %s158
      %p160 = scmp.eq.s32.totalorder %s159, 0
      %s162 = sadd.s32 %s161, 1
      %s163 = scalar_select %p160, %s161, %s162
      %p166 = pneg %p160
      %p167 = scmp.eq.s32.totalorder %s16, 3
      %p168 = por %p166, %p167
      %p169 = scmp.ne.s32.totalorder %s161, %s164
      %p170 = scmp.eq.s32.totalorder %s16, 0
      %p171 = por %p169, %p170
      %p172 = scmp.ne.s32.totalorder %s161, %s164
      %p173 = scmp.eq.s32.totalorder %s21, 3
      %p174 = por %p172, %p173
      %p175 = scmp.ne.s32.totalorder %s164, %s165
      %p176 = scmp.eq.s32.totalorder %s21, 0
      %p177 = por %p175, %p176
      %p178 = scmp.ne.s32.totalorder %s164, %s165
      %p179 = scmp.eq.s32.totalorder %s22, 3
      %p180 = por %p178, %p179
      %p182 = scmp.ne.s32.totalorder %s165, %s181
      %p183 = scmp.eq.s32.totalorder %s22, 0
      %p184 = por %p182, %p183
      %p185 = scmp.le.s32.totalorder 1, %s16
      %p186 = scmp.lt.s32.totalorder %s16, 5
      %p187 = pnand %p185, %p186
      %p188 = pneg %p187
      // Predicated region
      $region9: #{tpu_custom_call.1} parent=5 // pred_check
        _
      $region10: #{tpu_custom_call.1} parent=5 // pred_check_branch
        %190 = sbr.rel (%p187) target = $region12
      $region11: #{tpu_custom_call.1} parent=5 // pred_region
        %s191 = ssub.s32 %s16, 1
      $region12: #{tpu_custom_call.1} parent=5 // pred_fallthru
        _
      %p192 = scmp.lt.s32.totalorder %s16, 4
      // Predicated region
      $region13: #{tpu_custom_call.1} parent=5 // pred_check
        %p193 = pneg %p192
      $region14: #{tpu_custom_call.1} parent=5 // pred_check_branch
        %195 = sbr.rel (%p193) target = $region16
      $region15: #{tpu_custom_call.1} parent=5 // pred_region
        // Predicated region
        $region17: #{tpu_custom_call.1} parent=15 // pred_check
          %p196 = pneg %p57
        $region18: #{tpu_custom_call.1} parent=15 // pred_check_branch
          %198 = sbr.rel (%p196) target = $region20
        $region19: #{tpu_custom_call.1} parent=15 // pred_region
          %p199 = scmp.lt.s32.totalorder %s23, 3
          %s200 = scalar_select %p199, %s23, 3
          %p201 = scmp.lt.s32.totalorder %s24, 0
          %s202 = scalar_select %p201, %s24, 0
          %s203 = sadd.s32 %s202, %s200
          %s204 = smul.addr %s203, 8
          %s205 = scalar_lea.vmem %s0, %s204
        $region20: #{tpu_custom_call.1} parent=15 // pred_fallthru
          _
        // Predicated region
        $region21: #{tpu_custom_call.1} parent=15 // pred_check
          %p206 = pneg %p85
        $region22: #{tpu_custom_call.1} parent=15 // pred_check_branch
          %208 = sbr.rel (%p206) target = $region24
        $region23: #{tpu_custom_call.1} parent=15 // pred_region
          %s209 = sand.u32 %s75, 1
          %s210 = scalar_lea.sflag [#allocation3], %s209
          %s211 = sand.u32 %s75, 1
          %s212 = smul.addr %s211, 8
          %s213 = scalar_lea.vmem [#allocation2], %s212
          %215 = vsyncadd %s210, 0
          %s216 = sadd.s32 %s25, %s23
          %s217 = smul.addr %s216, 8
          %s218 = scalar_lea.hbm %s1, %s217
          %s220 = sshll.u32 %s218, 4
          %s221 = int_to_ptr.hbm [resolvable:$true] %s220
          %s222 = sshll.u32 %s213, 4
          %s223 = int_to_ptr.vmem [resolvable:$true] %s222
          %225 = dma.hbm_to_vmem [thread:$0]  %s221, 128, %s223, %s210
        $region24: #{tpu_custom_call.1} parent=15 // pred_fallthru
          _
        // Predicated region
        $region25: #{tpu_custom_call.1} parent=15 // pred_check
          %p226 = pneg %p113
        $region26: #{tpu_custom_call.1} parent=15 // pred_check_branch
          %228 = sbr.rel (%p226) target = $region28
        $region27: #{tpu_custom_call.1} parent=15 // pred_region
          %p229 = scmp.lt.s32.totalorder %s23, 3
          %s230 = scalar_select %p229, %s23, 3
          %p231 = scmp.lt.s32.totalorder %s24, 0
          %s232 = scalar_select %p231, %s24, 0
          %s233 = sadd.s32 %s232, %s230
          %s234 = smul.addr %s233, 8
          %s235 = scalar_lea.vmem %s2, %s234
        $region28: #{tpu_custom_call.1} parent=15 // pred_fallthru
          _
        // Predicated region
        $region29: #{tpu_custom_call.1} parent=15 // pred_check
          %p236 = pneg %p141
        $region30: #{tpu_custom_call.1} parent=15 // pred_check_branch
          %238 = sbr.rel (%p236) target = $region32
        $region31: #{tpu_custom_call.1} parent=15 // pred_region
          %p239 = scmp.lt.s32.totalorder %s23, 3
          %s240 = scalar_select %p239, %s23, 3
          %p241 = scmp.lt.s32.totalorder %s25, 0
          %s242 = scalar_select %p241, %s25, 0
          %s243 = sadd.s32 %s242, %s240
          %s244 = scalar_lea.vmem %s3, %s243
        $region32: #{tpu_custom_call.1} parent=15 // pred_fallthru
          _
      $region16: #{tpu_custom_call.1} parent=5 // pred_fallthru
        _
      %p245 = scmp.le.s32.totalorder 1, %s16
      %p246 = scmp.lt.s32.totalorder %s16, 5
      %p247 = pnand %p245, %p246
      %p248 = pneg %p247
      // Predicated region
      $region33: #{tpu_custom_call.1} parent=5 // pred_check
        _
      $region34: #{tpu_custom_call.1} parent=5 // pred_check_branch
        %250 = sbr.rel (%p247) target = $region36
      $region35: #{tpu_custom_call.1} parent=5 // pred_region
        %s251 = ssub.s32 %s16, 1
        %s252 = sand.u32 %s78, 1
        %s253 = scalar_lea.sflag [#allocation3], %s252
        %s254 = sand.u32 %s78, 1
        %s255 = smul.addr %s254, 8
        %s256 = scalar_lea.vmem [#allocation2], %s255
        // Predicated region
        $region37: #{tpu_custom_call.1} parent=35 // pred_check
          %p257 = pneg %p91
        $region38: #{tpu_custom_call.1} parent=35 // pred_check_branch
          %259 = sbr.rel (%p257) target = $region40
        $region39: #{tpu_custom_call.1} parent=35 // pred_region
          %261 = dma.done %s253, 128
        $region40: #{tpu_custom_call.1} parent=35 // pred_fallthru
          _
        %p262 = scmp.lt.s32.totalorder %s26, 3
        %s263 = scalar_select %p262, %s26, 3
        %p264 = scmp.lt.s32.totalorder %s27, 0
        %s265 = scalar_select %p264, %s27, 0
        %s266 = sadd.s32 %s265, %s263
        %s267 = smul.addr %s266, 8
        %s268 = scalar_lea.vmem %s0, %s267
        %p269 = pneg %p63
        %p270 = pneg %p60
        %s271 = sand.u32 %s78, 1
        %s272 = scalar_lea.sflag [#allocation3], %s271
        %s273 = sand.u32 %s78, 1
        %s274 = smul.addr %s273, 8
        %s275 = scalar_lea.vmem [#allocation2], %s274
        %p276 = pneg %p91
        %p277 = pneg %p88
        %p278 = scmp.lt.s32.totalorder %s26, 3
        %s279 = scalar_select %p278, %s26, 3
        %p280 = scmp.lt.s32.totalorder %s27, 0
        %s281 = scalar_select %p280, %s27, 0
        %s282 = sadd.s32 %s281, %s279
        %s283 = smul.addr %s282, 8
        %s284 = scalar_lea.vmem %s2, %s283
        %p285 = pneg %p119
        %p286 = pneg %p116
        %p287 = scmp.lt.s32.totalorder %s26, 3
        %s288 = scalar_select %p287, %s26, 3
        %p289 = scmp.lt.s32.totalorder %s28, 0
        %s290 = scalar_select %p289, %s28, 0
        %s291 = sadd.s32 %s290, %s288
        %s292 = scalar_lea.vmem %s3, %s291
        %p293 = pneg %p147
        %p294 = pneg %p144
        %p295 = pneg %p177
        %p296 = pneg %p174
        %s297 = sand.u32 %s164, 1
        %s298 = scalar_lea.sflag [#allocation4], %s297
        %s299 = sand.u32 %s164, 1
        %s300 = smul.addr %s299, 8
        %s301 = scalar_lea.vmem [#allocation5], %s300
        %p302 = scmp.lt.s32.totalorder %s26, 3
        %s303 = scalar_select %p302, %s26, 3
        %p304 = scmp.lt.s32.totalorder %s27, 0
        %s305 = scalar_select %p304, %s27, 0
        %s306 = sadd.s32 %s305, %s303
        %s307 = smul.addr %s306, 8
        %s308 = scalar_lea.vmem %s0, %s307
        %p309 = scmp.lt.s32.totalorder %s26, 3
        %s310 = scalar_select %p309, %s26, 3
        %p311 = scmp.lt.s32.totalorder %s27, 0
        %s312 = scalar_select %p311, %s27, 0
        %s313 = sadd.s32 %s312, %s310
        %s314 = smul.addr %s313, 8
        %s315 = scalar_lea.vmem %s2, %s314
        %p316 = scmp.lt.s32.totalorder %s26, 3
        %s317 = scalar_select %p316, %s26, 3
        %p318 = scmp.lt.s32.totalorder %s28, 0
        %s319 = scalar_select %p318, %s28, 0
        %s320 = sadd.s32 %s319, %s317
        %s321 = scalar_lea.vmem %s3, %s320
        %v322 = vld [vmem:[%s308] sm:$0xff]
        %v323 = vld [vmem:[%s256] sm:$0xff]
        %vm324 = vcmask 261120
        %v326 = vsel %vm324, %v322, 0
        %v329 = vsel %vm324, %v323, 0
        %331 = vmatpush.xpose.msra.mxu0 0.0
        %332 = vmatpush.xpose.msra.mxu0 0.0
        %333 = vmatpush.xpose.msra.mxu0 0.0
        %334 = vmatpush.xpose.msra.mxu0 0.0
        %335 = vmatpush.xpose.msra.mxu0 0.0
        %336 = vmatpush.xpose.msra.mxu0 0.0
        %337 = vmatpush.xpose.msra.mxu0 0.0
        %338 = vmatpush.xpose.msra.mxu0 0.0
        %339 = vmatpush.xpose.msra.mxu0 0.0
        %340 = vmatpush.xpose.msra.mxu0 0.0
        %341 = vmatpush.xpose.msra.mxu0 0.0
        %342 = vmatpush.xpose.msra.mxu0 0.0
        %343 = vmatpush.xpose.msra.mxu0 0.0
        %344 = vmatpush.xpose.msra.mxu0 0.0
        %345 = vmatpush.xpose.msra.mxu0 0.0
        %346 = vmatpush.xpose.msra.mxu0 %v329
        %347 = vmatmul.f32.gmra.mxu0 %v326
        %v348 = vpop.f32.mrf.mxu0
        %v349 = vadd.f32 0.0, %v348
        %350 = vdwg.mxu0
        %v351 = vld [vmem:[%s315] sm:$0xff]
        %353 = vset.pattern.permute.xlu0 0
        %354 = vperm.xlu0 %353, %v351
        %v355 = vpop.permute.xlu0 %354
        %v357 = vmul.f32 %v349, %v355
        %v358 = vld [vmem:[%s321] sm:$0x1]
        %v360 = vperm.slane %v358, 0
        %v362 = vmul.f32 %v357, %v360
        %vm363 = vcmask 64512
        %364 = vst.msk [vmem:[%s301] sm:$0xff] %vm363, %v362
        %s365 = sand.u32 %s164, 1
        %s366 = scalar_lea.sflag [#allocation4], %s365
        %s367 = sand.u32 %s164, 1
        %s368 = smul.addr %s367, 8
        %s369 = scalar_lea.vmem [#allocation5], %s368
        // Predicated region
        $region41: #{tpu_custom_call.1} parent=35 // pred_check
          %p370 = pneg %p174
        $region42: #{tpu_custom_call.1} parent=35 // pred_check_branch
          %372 = sbr.rel (%p370) target = $region44
        $region43: #{tpu_custom_call.1} parent=35 // pred_region
          %374 = vsyncadd %s366, 0
          %s375 = sadd.s32 %s28, %s27
          %s376 = sadd.s32 %s375, %s26
          %s377 = smul.addr %s376, 8
          %s378 = scalar_lea.hbm %s4, %s377
          %s380 = sshll.u32 %s369, 4
          %s381 = int_to_ptr.vmem [resolvable:$true] %s380
          %s382 = sshll.u32 %s378, 4
          %s383 = int_to_ptr.hbm [resolvable:$true] %s382
          %385 = dma.vmem_to_hbm [thread:$0]  %s381, 128, %s383, %s366
        $region44: #{tpu_custom_call.1} parent=35 // pred_fallthru
          _
      $region36: #{tpu_custom_call.1} parent=5 // pred_fallthru
        _
      %p386 = scmp.le.s32.totalorder 2, %s16
      // Predicated region
      $region45: #{tpu_custom_call.1} parent=5 // pred_check
        %p387 = pneg %p386
      $region46: #{tpu_custom_call.1} parent=5 // pred_check_branch
        %389 = sbr.rel (%p387) target = $region48
      $region47: #{tpu_custom_call.1} parent=5 // pred_region
        %s390 = ssub.s32 %s16, 2
        // Predicated region
        $region49: #{tpu_custom_call.1} parent=47 // pred_check
          %p391 = pneg %p180
        $region50: #{tpu_custom_call.1} parent=47 // pred_check_branch
          %393 = sbr.rel (%p391) target = $region52
        $region51: #{tpu_custom_call.1} parent=47 // pred_region
          %s394 = sand.u32 %s165, 1
          %s395 = scalar_lea.sflag [#allocation4], %s394
          %s396 = sand.u32 %s165, 1
          %s397 = smul.addr %s396, 8
          %s398 = scalar_lea.vmem [#allocation5], %s397
          %400 = dma.done %s395, 128
        $region52: #{tpu_custom_call.1} parent=47 // pred_fallthru
          _
      $region48: #{tpu_custom_call.1} parent=5 // pred_fallthru
        _
    $region6: #{tpu_custom_call.1} parent=1 // loop_footer
      %s20 = sadd.s32 1, %s16
    $region7: #{tpu_custom_call.1} parent=1 // loop_footer_branch
      %15 = sbr.rel target = $region3
    $region8: #{tpu_custom_call.1} parent=1 // loop_exit
      _
    %401 = vsyncpa [#allocation3], 1
    %s402 = scalar_lea.sflag [#allocation3], 1
    %403 = vsyncpa %s402, 1
    %404 = vsyncpa [#allocation4], 1
    %s405 = scalar_lea.sflag [#allocation4], 1
    %406 = vsyncpa %s405, 1

</llo_original>
